<compile_context>
chip_gen: v7x
topology: tpu7x:2x2x1
jax: 0.10.0
libtpu: 0.0.40
codegen_flags: <defaults>
</compile_context>

<pallas_src>
import functools

import jax
import jax.numpy as jnp
from jax import lax
from jax.experimental import pallas as pl
from jax.experimental.pallas import tpu as pltpu


# ------------------------------ tiling helper --------------------------------

def _pick_k_tile(K, target, align=128):
    """Largest tile <= target that divides K exactly (multiple of `align`).

    The K (reduction) axis must be tiled exactly -- a ragged K edge would feed
    garbage into the f32 accumulator.  Falls back to the full K extent (always
    a legal block shape).
    """
    if K <= target:
        return K
    t = (target // align) * align
    while t >= align:
        if K % t == 0:
            return t
        t -= align
    return K


# ------------------------------ tiled linear ---------------------------------

def _matmul_kernel(x_ref, w_ref, o_ref, acc_ref, *, mxu_dtype):
    @pl.when(pl.program_id(2) == 0)
    def _init():
        acc_ref[...] = jnp.zeros_like(acc_ref)

    acc_ref[...] += jnp.dot(
        x_ref[...].astype(mxu_dtype),
        w_ref[...].astype(mxu_dtype),
        preferred_element_type=jnp.float32,
    )

    @pl.when(pl.program_id(2) == pl.num_programs(2) - 1)
    def _store():
        o_ref[...] = acc_ref[...].astype(o_ref.dtype)


def linear_pallas(x2d, w, *, mxu_dtype, tm=512, tn=512, tk=512):
    """x2d @ w as a K-pipelined, (M,N)-parallel tiled matmul with ragged edges."""
    M, K = x2d.shape
    Kw, Nout = w.shape
    assert K == Kw
    # M / Nout axes: ragged tiling via cdiv.  Either the block is the full
    # extent (always legal) or it is 512 (8- / 128-aligned); the last block may
    # overhang -- OOB reads only pollute rows/cols that are write-masked.
    tm = M if M <= tm else tm
    tn = Nout if Nout <= tn else tn
    tk = _pick_k_tile(K, tk)
    grid = (pl.cdiv(M, tm), pl.cdiv(Nout, tn), K // tk)

    return pl.pallas_call(
        functools.partial(_matmul_kernel, mxu_dtype=mxu_dtype),
        out_shape=jax.ShapeDtypeStruct((M, Nout), x2d.dtype),
        grid=grid,
        in_specs=[
            pl.BlockSpec((tm, tk), lambda i, j, k: (i, k)),
            pl.BlockSpec((tk, tn), lambda i, j, k: (k, j)),
        ],
        out_specs=pl.BlockSpec((tm, tn), lambda i, j, k: (i, j)),
        scratch_shapes=[pltpu.VMEM((tm, tn), jnp.float32)],
        compiler_params=pltpu.CompilerParams(
            dimension_semantics=("parallel", "parallel", "arbitrary"),
            vmem_limit_bytes=32 * 1024 * 1024,
        ),
    )(x2d, w)


# --------------------- fused multi-head attention + projection ----------------

def _mhsa_proj_kernel(qkv_ref, wp_ref, bp_ref, o_ref, *, num_heads, head_dim,
                      mxu_dtype, approx_recip):
    # qkv_ref block: (1, N, 3*D) for one batch element; columns are laid out
    # exactly like the PyTorch reshape (B,N,3,H,hd): col = s*D + h*hd + d.
    # The attention scale is already folded into the q columns (param prep).
    D = num_heads * head_dim
    qkv = qkv_ref[0]                      # (N, 3*D)
    wp = wp_ref[...]                      # (D, D)

    # TODO(synk): for N >~ 1k or num_heads >~ 16, switch to a flash/online-
    # softmax variant with a query-tile + KV 'arbitrary' grid axis (and head-
    # pair fori_loop) to keep VMEM O(tq*tk) and feed both v7x TensorCores.
    acc = None
    for h in range(num_heads):
        lo = h * head_dim
        hi = lo + head_dim
        q = qkv[:, lo:hi].astype(mxu_dtype)                 # (N, hd), pre-scaled
        k = qkv[:, D + lo:D + hi].astype(mxu_dtype)         # (N, hd)
        v = qkv[:, 2 * D + lo:2 * D + hi].astype(mxu_dtype)  # (N, hd)

        # q @ k^T without an explicit transpose (contract last dims on the MXU).
        s = lax.dot_general(q, k, (((1,), (1,)), ((), ())),
                            preferred_element_type=jnp.float32)        # (N, N)
        s = s - jnp.max(s, axis=-1, keepdims=True)                     # stable softmax (f32)
        p = jnp.exp(s)
        p = p * pl.reciprocal(jnp.sum(p, axis=-1, keepdims=True),
                              approx=approx_recip)
        # attn_drop: identity (rate 0.0)
        out_h = jnp.dot(p.astype(mxu_dtype), v,
                        preferred_element_type=jnp.float32)            # (N, hd)
        # Fused output projection: proj(concat_h out_h) == sum_h out_h @ Wp[h rows].
        contrib = jnp.dot(out_h.astype(mxu_dtype),
                          wp[lo:hi, :].astype(mxu_dtype),
                          preferred_element_type=jnp.float32)          # (N, D)
        acc = contrib if acc is None else acc + contrib

    # proj bias added in f32; proj_drop identity.  Single lane-dense store.
    o_ref[0] = (acc + bp_ref[...]).astype(o_ref.dtype)


def mhsa_proj_pallas(qkv, w_proj, b_proj, num_heads, head_dim, *, mxu_dtype,
                     approx_recip, out_dtype):
    """qkv: (B, N, 3*D) -> proj(MHSA(qkv)) + b_proj, shape (B, N, D)."""
    B, N, threeD = qkv.shape
    D = num_heads * head_dim
    assert threeD == 3 * D
    kern = functools.partial(
        _mhsa_proj_kernel, num_heads=num_heads, head_dim=head_dim,
        mxu_dtype=mxu_dtype, approx_recip=approx_recip)
    return pl.pallas_call(
        kern,
        out_shape=jax.ShapeDtypeStruct((B, N, D), out_dtype),
        grid=(B,),
        in_specs=[
            pl.BlockSpec((1, N, 3 * D), lambda b: (b, 0, 0)),
            pl.BlockSpec((D, D), lambda b: (0, 0)),        # w_proj, resident
            pl.BlockSpec((1, D), lambda b: (0, 0)),        # b_proj, resident
        ],
        out_specs=pl.BlockSpec((1, N, D), lambda b: (b, 0, 0)),
        compiler_params=pltpu.CompilerParams(
            dimension_semantics=("parallel",),
            vmem_limit_bytes=32 * 1024 * 1024,
        ),
    )(qkv, w_proj, b_proj.reshape(1, D))


# ------------------------------ param prep & forward --------------------------

def prepare_params(params, num_heads, *, mxu_dtype):
    """One-time host-side prep: fold the attention scale into the q-columns of
    w_qkv, and (bf16 path) store weights bf16 in HBM.  b_proj stays f32 (added
    in f32 inside the kernel)."""
    D = params["w_qkv"].shape[0]
    head_dim = D // num_heads
    scale = head_dim ** (-0.5)
    w_qkv = params["w_qkv"]
    w_qkv = jnp.concatenate([w_qkv[:, :D] * scale, w_qkv[:, D:]], axis=1)
    store_dtype = jnp.bfloat16 if mxu_dtype == jnp.bfloat16 else w_qkv.dtype
    return {
        "w_qkv": w_qkv.astype(store_dtype),
        "w_proj": params["w_proj"].astype(store_dtype),
        "b_proj": params["b_proj"].astype(jnp.float32),
    }


def attention_forward(x, prepared, num_heads, *, mxu_dtype=jnp.bfloat16,
                      approx_recip=True):
    """x: (B, N, D) -> (B, N, D).  `prepared` comes from prepare_params."""
    B, N, D = x.shape
    head_dim = D // num_heads
    store_dtype = prepared["w_qkv"].dtype

    # qkv transform: Linear(D, 3D, bias=False); intermediate stays in
    # store_dtype (bf16 on the bf16 path -> half the HBM traffic).
    qkv = linear_pallas(x.reshape(B * N, D).astype(store_dtype),
                        prepared["w_qkv"], mxu_dtype=mxu_dtype)
    qkv = qkv.reshape(B, N, 3 * D)

    # MHSA + fused output projection + bias; final output in x's dtype.
    return mhsa_proj_pallas(qkv, prepared["w_proj"], prepared["b_proj"],
                            num_heads, head_dim, mxu_dtype=mxu_dtype,
                            approx_recip=approx_recip, out_dtype=x.dtype)


# --------------------------- pure-JAX reference check -------------------------

def attention_reference(x, params, num_heads):
    B, N, D = x.shape
    hd = D // num_heads
    scale = hd ** (-0.5)
    hp = jax.lax.Precision.HIGHEST
    qkv = jnp.dot(x, params["w_qkv"], precision=hp)
    qkv = qkv.reshape(B, N, 3, num_heads, hd).transpose(2, 0, 3, 1, 4)
    q, k, v = qkv[0], qkv[1], qkv[2]
    attn = jnp.einsum("bhqd,bhkd->bhqk", q, k, precision=hp) * scale
    attn = jax.nn.softmax(attn, axis=-1)
    o = jnp.einsum("bhqk,bhkd->bhqd", attn, v, precision=hp)
    o = o.transpose(0, 2, 1, 3).reshape(B, N, D)
    return jnp.dot(o, params["w_proj"], precision=hp) + params["b_proj"]


# ------------------------------------- main -----------------------------------

if __name__ == "__main__":
    def make_case(key, B, N, D):
        k_x, k_qkv, k_pw, k_pb = jax.random.split(key, 4)
        x = jax.random.normal(k_x, (B, N, D), dtype=jnp.float32)
        params = {
            "w_qkv": jax.random.normal(k_qkv, (D, 3 * D), dtype=jnp.float32) * 0.05,
            "w_proj": jax.random.normal(k_pw, (D, D), dtype=jnp.float32) * 0.05,
            "b_proj": jax.random.normal(k_pb, (D,), dtype=jnp.float32) * 0.01,
        }
        return x, params

    key = jax.random.PRNGKey(0)
    k1, k2 = jax.random.split(key)

    # ---- case 1: small shape (B=2, N=8, D=32, heads=8, hd=4) ----
    num_heads = 8
    x, params = make_case(k1, 2, 8, 32)
    ref = attention_reference(x, params, num_heads)

    # faithful f32 path (debug; exact reciprocal for tight tolerance)
    p_f32 = prepare_params(params, num_heads, mxu_dtype=jnp.float32)
    out = attention_forward(x, p_f32, num_heads,
                            mxu_dtype=jnp.float32, approx_recip=False)
    out = jax.block_until_ready(out)
    assert out.shape == x.shape
    assert jnp.allclose(out, ref, atol=1e-3, rtol=1e-3), "f32 mismatch vs. reference"

    # recommended bf16 path (bf16 HBM storage + bf16 MXU, f32 softmax/accum)
    p_bf16 = prepare_params(params, num_heads, mxu_dtype=jnp.bfloat16)
    out_bf = attention_forward(x, p_bf16, num_heads,
                               mxu_dtype=jnp.bfloat16, approx_recip=True)
    out_bf = jax.block_until_ready(out_bf)
    assert jnp.allclose(out_bf, ref, atol=3e-2, rtol=3e-2), "bf16 mismatch vs. reference"

    # ---- case 2: ViT-like shape exercising ragged M/N tiling and hd=64 ----
    B2, N2, D2, H2 = 4, 197, 192, 3      # M = 788 -> ragged 512-row tiles
    x2, params2 = make_case(k2, B2, N2, D2)
    ref2 = attention_reference(x2, params2, H2)
    p2 = prepare_params(params2, H2, mxu_dtype=jnp.bfloat16)
    out2 = attention_forward(x2, p2, H2,
                             mxu_dtype=jnp.bfloat16, approx_recip=True)
    out2 = jax.block_until_ready(out2)
    assert out2.shape == x2.shape
    assert jnp.allclose(out2, ref2, atol=5e-2, rtol=5e-2), "ViT-shape bf16 mismatch"

    print("KERNEL_OK")
</pallas_src>

<mosaic_0001>
module attributes {stable_mosaic.version = 11 : i64} {
  func.func @_matmul_kernel(%arg0: i32, %arg1: i32, %arg2: i32, %arg3: memref<16x32xf32, #tpu.memory_space<vmem>>, %arg4: memref<32x96xf32, #tpu.memory_space<vmem>>, %arg5: memref<16x96xf32, #tpu.memory_space<vmem>>, %arg6: memref<16x96xf32, #tpu.memory_space<vmem>>) attributes {dimension_semantics = [#tpu.dimension_semantics<parallel>, #tpu.dimension_semantics<parallel>, #tpu.dimension_semantics<arbitrary>], iteration_bounds = array<i64: 1, 1, 1>, scalar_prefetch = 0 : i64, scratch_operands = 1 : i64, tpu.core_type = #tpu.core_type<tc>, window_params = [{transform_indices = @transform_0, window_bounds = array<i64: 16, 32>}, {transform_indices = @transform_1, window_bounds = array<i64: 32, 96>}, {transform_indices = @transform_2, window_bounds = array<i64: 16, 96>}]} {
    %c0_i32 = arith.constant 0 : i32
    %0 = arith.cmpi eq, %arg2, %c0_i32 : i32
    %1 = arith.extui %0 : i1 to i32
    %c0_i32_0 = arith.constant 0 : i32
    %2 = arith.cmpi ne, %1, %c0_i32_0 : i32
    scf.if %2 {
      %cst_10 = arith.constant 0.000000e+00 : f32
      %12 = vector.broadcast %cst_10 : f32 to vector<16x96xf32>
      %c0_11 = arith.constant 0 : index
      %c0_12 = arith.constant 0 : index
      %13 = vector.load %arg6[%c0_11, %c0_12] : memref<16x96xf32, #tpu.memory_space<vmem>>, vector<16x96xf32>
      tpu.vector_store %arg6[%c0_11, %c0_12], %12 {strides = array<i32>} : memref<16x96xf32, #tpu.memory_space<vmem>>, vector<16x96xf32>,
    } else {
    }
    %c0 = arith.constant 0 : index
    %c0_1 = arith.constant 0 : index
    %3 = vector.load %arg6[%c0, %c0_1] : memref<16x96xf32, #tpu.memory_space<vmem>>, vector<16x96xf32>
    %c0_2 = arith.constant 0 : index
    %c0_3 = arith.constant 0 : index
    %4 = vector.load %arg3[%c0_2, %c0_3] : memref<16x32xf32, #tpu.memory_space<vmem>>, vector<16x32xf32>
    %c0_4 = arith.constant 0 : index
    %c0_5 = arith.constant 0 : index
    %5 = vector.load %arg4[%c0_4, %c0_5] : memref<32x96xf32, #tpu.memory_space<vmem>>, vector<32x96xf32>
    %cst = arith.constant dense<0.000000e+00> : vector<16x96xf32>
    %6 = tpu.matmul %4, %5, %cst {dimension_numbers = #tpu.dot_dimension_numbers<[1], [0], [0], [1], [0, 0, 1, 1], [], []>} : vector<16x32xf32>, vector<32x96xf32>, vector<16x96xf32> -> vector<16x96xf32>
    %7 = arith.addf %3, %6 : vector<16x96xf32>
    %c0_6 = arith.constant 0 : index
    %c0_7 = arith.constant 0 : index
    %8 = vector.load %arg6[%c0_6, %c0_7] : memref<16x96xf32, #tpu.memory_space<vmem>>, vector<16x96xf32>
    tpu.vector_store %arg6[%c0_6, %c0_7], %7 {strides = array<i32>} : memref<16x96xf32, #tpu.memory_space<vmem>>, vector<16x96xf32>,
    %c0_i32_8 = arith.constant 0 : i32
    %9 = arith.cmpi eq, %arg2, %c0_i32_8 : i32
    %10 = arith.extui %9 : i1 to i32
    %c0_i32_9 = arith.constant 0 : i32
    %11 = arith.cmpi ne, %10, %c0_i32_9 : i32
    scf.if %11 {
      %c0_10 = arith.constant 0 : index
      %c0_11 = arith.constant 0 : index
      %12 = vector.load %arg6[%c0_10, %c0_11] : memref<16x96xf32, #tpu.memory_space<vmem>>, vector<16x96xf32>
      %c0_12 = arith.constant 0 : index
      %c0_13 = arith.constant 0 : index
      %13 = vector.load %arg5[%c0_12, %c0_13] : memref<16x96xf32, #tpu.memory_space<vmem>>, vector<16x96xf32>
      tpu.vector_store %arg5[%c0_12, %c0_13], %12 {strides = array<i32>} : memref<16x96xf32, #tpu.memory_space<vmem>>, vector<16x96xf32>,
    } else {
    }
    return
  }
  func.func @transform_0(%arg0: i32, %arg1: i32, %arg2: i32) -> (i32, i32) {
    %c0_i32 = arith.constant 0 : i32
    return %arg0, %arg2 : i32, i32
  }
  func.func @transform_1(%arg0: i32, %arg1: i32, %arg2: i32) -> (i32, i32) {
    %c0_i32 = arith.constant 0 : i32
    return %arg2, %arg1 : i32, i32
  }
  func.func @transform_2(%arg0: i32, %arg1: i32, %arg2: i32) -> (i32, i32) {
    %c0_i32 = arith.constant 0 : i32
    return %arg0, %arg1 : i32, i32
  }
}

</mosaic_0001>

<llo_original>
// kernel: tpu_custom_call.1
$region0: #{tpu_custom_call.1}
  #allocation0 [shape = 'u32[]', space=smem, size = 0x4, offset = 0x4, fixed_abs, tag = 'smem constant byte address 0x4 - core index']
  #allocation1 [shape = 'u32[144,128]{1,0:T(1,128)}', space=vmem, size = 0x12000, scoped, tag = 'internal scratch']
  #allocation2 [shape = 'f32[16,96]{1,0:T(8,128)}', space=vmem, size = 0x2000, scoped, tag = 'scratch operand']
  %s0 = inlined_call_operand.hbm [shape: f32[16,32], index: 0, kind: input, shape index: {}]
  %s1 = inlined_call_operand.hbm [shape: f32[32,96], index: 1, kind: input, shape index: {}]
  %s2 = inlined_call_operand.hbm [shape: f32[16,96], index: 2, kind: output, shape index: {}]
  %s3 = sld [smem:[#allocation0]]
  $region34: #{tpu_custom_call.1} parent=0
    _
  %s5 = ssub.s32 1, %s3
  %s6 = scalar_select 0, %s5, %s3
  $region1: #{tpu_custom_call.1} parent=0
    #allocation3 [shape = 'u8[8192]{0}', space=vmem, size = 0x2000, scoped, tag = 'input window, operand 0, single buffered']
    #allocation4 [shape = 's32[1]{0}', space=sflag, size = 0x4, scoped, tag = 'scoped memory for tpu_custom_call.1']
    #allocation5 [shape = 's32[1]{0}', space=sflag, size = 0x4, scoped, tag = 'scoped memory for tpu_custom_call.1']
    #allocation6 [shape = 'u8[16384]{0}', space=vmem, size = 0x4000, scoped, tag = 'input window, operand 1, single buffered']
    #allocation7 [shape = 's32[1]{0}', space=sflag, size = 0x4, scoped, tag = 'scoped memory for tpu_custom_call.1']
    #allocation8 [shape = 'u8[8192]{0}', space=vmem, size = 0x2000, scoped, tag = 'output window, operand 0, single buffered']
    %7 = vsyncpa [#allocation4], 0
    %8 = vsyncpa [#allocation7], 0
    %9 = vsyncpa [#allocation5], 0
    // Predicated region
    $region2: #{tpu_custom_call.1} parent=1 // pred_check
      _
    $region3: #{tpu_custom_call.1} parent=1 // pred_check_branch
      %11 = sbr.rel (0) target = $region5
    $region4: #{tpu_custom_call.1} parent=1 // pred_region
      %s13 = ssub.s32 256, 256
      %14 = vsyncadd [#allocation4], %s13
      %s15 = sshll.u32 [#allocation3], 4
      %s16 = int_to_ptr.vmem [resolvable:$true] %s15
      %21 = dma.hbm_to_vmem [thread:$0]  %s0, 256, %s16, [#allocation4], 128, 128, 8
    $region5: #{tpu_custom_call.1} parent=1 // pred_fallthru
      _
    // Predicated region
    $region6: #{tpu_custom_call.1} parent=1 // pred_check
      _
    $region7: #{tpu_custom_call.1} parent=1 // pred_check_branch
      %23 = sbr.rel (0) target = $region9
    $region8: #{tpu_custom_call.1} parent=1 // pred_region
      %s25 = ssub.s32 512, 512
      %26 = vsyncadd [#allocation7], %s25
      %s27 = sshll.u32 [#allocation6], 4
      %s28 = int_to_ptr.vmem [resolvable:$true] %s27
      %33 = dma.hbm_to_vmem [thread:$0]  %s1, 512, %s28, [#allocation7], 128, 128, 8
    $region9: #{tpu_custom_call.1} parent=1 // pred_fallthru
      _
    // Predicated region
    $region10: #{tpu_custom_call.1} parent=1 // pred_check
      _
    $region11: #{tpu_custom_call.1} parent=1 // pred_check_branch
      %35 = sbr.rel (0) target = $region13
    $region12: #{tpu_custom_call.1} parent=1 // pred_region
      %36 = dma.done [#allocation4], 256
    $region13: #{tpu_custom_call.1} parent=1 // pred_fallthru
      _
    // Predicated region
    $region14: #{tpu_custom_call.1} parent=1 // pred_check
      _
    $region15: #{tpu_custom_call.1} parent=1 // pred_check_branch
      %38 = sbr.rel (0) target = $region17
    $region16: #{tpu_custom_call.1} parent=1 // pred_region
      %39 = dma.done [#allocation7], 512
    $region17: #{tpu_custom_call.1} parent=1 // pred_fallthru
      _
    %p40 = scmp.eq.s32.totalorder 0, 0
    // Predicated region
    $region18: #{tpu_custom_call.1} parent=1 // pred_check
      %p41 = pneg %p40
    $region19: #{tpu_custom_call.1} parent=1 // pred_check_branch
      %43 = sbr.rel (%p41) target = $region21
    $region20: #{tpu_custom_call.1} parent=1 // pred_region
      %vm44 = vcmask 785408
      %45 = vst.msk [vmem:[#allocation2] sm:$0xff] %vm44, 0.0
      %46 = vst.msk [vmem:[#allocation2 + $0x8] sm:$0xff] %vm44, 0.0
    $region21: #{tpu_custom_call.1} parent=1 // pred_fallthru
      _
    %v47 = vld [vmem:[#allocation2] sm:$0xff]
    %v48 = vld [vmem:[#allocation2 + $0x8] sm:$0xff]
    %v49 = vld [vmem:[#allocation3] sm:$0xff]
    %v50 = vld [vmem:[#allocation3 + $0x8] sm:$0xff]
    %v51 = vld [vmem:[#allocation6] sm:$0xff]
    %v52 = vld [vmem:[#allocation6 + $0x8] sm:$0xff]
    %v53 = vld [vmem:[#allocation6 + $0x10] sm:$0xff]
    %v54 = vld [vmem:[#allocation6 + $0x18] sm:$0xff]
    %vm55 = vcmask 261120
    %v57 = vsel %vm55, %v49, 0
    %v60 = vsel %vm55, %v50, 0
    %62 = vmatprep.subr.mxu0 0.0
    %63 = vmatpush1.msra.mxu0 %v51
    %64 = vmatprep.subr.mxu0 0.0
    %65 = vmatpush1.msra.mxu0 %v52
    %66 = vmatprep.subr.mxu0 0.0
    %67 = vmatpush1.msra.mxu0 %v53
    %68 = vmatprep.subr.mxu0 0.0
    %69 = vmatpush1.msra.mxu0 %v54
    %70 = vmatprep.subr.mxu0 0.0
    %71 = vmatpush1.msra.mxu0 0.0
    %72 = vmatprep.subr.mxu0 0.0
    %73 = vmatpush1.msra.mxu0 0.0
    %74 = vmatprep.subr.mxu0 0.0
    %75 = vmatpush1.msra.mxu0 0.0
    %76 = vmatprep.subr.mxu0 0.0
    %77 = vmatpush1.msra.mxu0 0.0
    %78 = vmatprep.subr.mxu0 0.0
    %79 = vmatpush1.msra.mxu0 0.0
    %80 = vmatprep.subr.mxu0 0.0
    %81 = vmatpush1.msra.mxu0 0.0
    %82 = vmatprep.subr.mxu0 0.0
    %83 = vmatpush1.msra.mxu0 0.0
    %84 = vmatprep.subr.mxu0 0.0
    %85 = vmatpush1.msra.mxu0 0.0
    %86 = vmatprep.subr.mxu0 0.0
    %87 = vmatpush1.msra.mxu0 0.0
    %88 = vmatprep.subr.mxu0 0.0
    %89 = vmatpush1.msra.mxu0 0.0
    %90 = vmatprep.subr.mxu0 0.0
    %91 = vmatpush1.msra.mxu0 0.0
    %92 = vmatprep.subr.mxu0 0.0
    %93 = vmatpush1.msra.mxu0 0.0
    %94 = vmatprep.subr.mxu0 0.0
    %95 = vmatpush1.msra.mxu0 0.0
    %96 = vmatprep.subr.mxu0 0.0
    %97 = vmatpush1.msra.mxu0 0.0
    %98 = vmatprep.subr.mxu0 0.0
    %99 = vmatpush1.msra.mxu0 0.0
    %100 = vmatprep.subr.mxu0 0.0
    %101 = vmatpush1.msra.mxu0 0.0
    %102 = vmatprep.subr.mxu0 0.0
    %103 = vmatpush1.msra.mxu0 0.0
    %104 = vmatprep.subr.mxu0 0.0
    %105 = vmatpush1.msra.mxu0 0.0
    %106 = vmatprep.subr.mxu0 0.0
    %107 = vmatpush1.msra.mxu0 0.0
    %108 = vmatprep.subr.mxu0 0.0
    %109 = vmatpush1.msra.mxu0 0.0
    %110 = vmatprep.subr.mxu0 0.0
    %111 = vmatpush1.msra.mxu0 0.0
    %112 = vmatprep.subr.mxu0 0.0
    %113 = vmatpush1.msra.mxu0 0.0
    %114 = vmatprep.subr.mxu0 0.0
    %115 = vmatpush1.msra.mxu0 0.0
    %116 = vmatprep.subr.mxu0 0.0
    %117 = vmatpush1.msra.mxu0 0.0
    %118 = vmatprep.subr.mxu0 0.0
    %119 = vmatpush1.msra.mxu0 0.0
    %120 = vmatprep.subr.mxu0 0.0
    %121 = vmatpush1.msra.mxu0 0.0
    %122 = vmatprep.subr.mxu0 0.0
    %123 = vmatpush1.msra.mxu0 0.0
    %124 = vmatprep.subr.mxu0 0.0
    %125 = vmatpush1.msra.mxu0 0.0
    %126 = vmatprep.mubr.f32.mxu0 0.0
    %127 = vmatmul.mubr.f32.gmra.mrb[0].mxu0 %v57
    %v128 = vpop.f32.mrb[0].mxu0
    %v129 = vadd.f32 0.0, %v128
    %v130 = vpop.f32.mrb[0].mxu0
    %131 = vmatprep.mubr.f32.mxu0 0.0
    %132 = vmatmul.mubr.f32.gmra.mrb[0].mxu0 %v60
    %v133 = vpop.f32.mrb[0].mxu0
    %v134 = vadd.f32 0.0, %v133
    %v135 = vpop.f32.mrb[0].mxu0
    %136 = vdwg.mxu0
    %v137 = vadd.f32 %v47, %v129
    %v138 = vadd.f32 %v48, %v134
    %vm139 = vcmask 785408
    %140 = vst.msk [vmem:[#allocation2] sm:$0xff] %vm139, %v137
    %141 = vst.msk [vmem:[#allocation2 + $0x8] sm:$0xff] %vm139, %v138
    // Predicated region
    $region22: #{tpu_custom_call.1} parent=1 // pred_check
      %p142 = pneg %p40
    $region23: #{tpu_custom_call.1} parent=1 // pred_check_branch
      %144 = sbr.rel (%p142) target = $region25
    $region24: #{tpu_custom_call.1} parent=1 // pred_region
      %v145 = vld [vmem:[#allocation2] sm:$0xff]
      %v146 = vld [vmem:[#allocation2 + $0x8] sm:$0xff]
      %147 = vst.msk [vmem:[#allocation8] sm:$0xff] %vm139, %v145
      %148 = vst.msk [vmem:[#allocation8 + $0x8] sm:$0xff] %vm139, %v146
    $region25: #{tpu_custom_call.1} parent=1 // pred_fallthru
      _
    // Predicated region
    $region26: #{tpu_custom_call.1} parent=1 // pred_check
      _
    $region27: #{tpu_custom_call.1} parent=1 // pred_check_branch
      %150 = sbr.rel (0) target = $region29
    $region28: #{tpu_custom_call.1} parent=1 // pred_region
      %s152 = ssub.s32 256, 256
      %153 = vsyncadd [#allocation5], %s152
      %s154 = sshll.u32 [#allocation8], 4
      %s155 = int_to_ptr.vmem [resolvable:$true] %s154
      %160 = dma.vmem_to_hbm [thread:$0]  %s155, 256, %s2, [#allocation5], 128, 128, 8
    $region29: #{tpu_custom_call.1} parent=1 // pred_fallthru
      _
    // Predicated region
    $region30: #{tpu_custom_call.1} parent=1 // pred_check
      _
    $region31: #{tpu_custom_call.1} parent=1 // pred_check_branch
      %162 = sbr.rel (0) target = $region33
    $region32: #{tpu_custom_call.1} parent=1 // pred_region
      %163 = dma.done [#allocation5], 256
    $region33: #{tpu_custom_call.1} parent=1 // pred_fallthru
      _
    %164 = vsyncpa [#allocation4], 1
    %165 = vsyncpa [#allocation7], 1
    %166 = vsyncpa [#allocation5], 1

</llo_original>
